<compile_context>
chip_gen: v5e
topology: v5e:2x2
jax: 0.10.0
libtpu: 0.0.40
codegen_flags: <defaults>
</compile_context>

<pallas_src>
import functools

import jax
import jax.numpy as jnp
from jax import lax
from jax.experimental import pallas as pl
from jax.experimental.pallas import tpu as pltpu


# ---------------------------------------------------------------------------
# Fused path: whole shard chain in ONE kernel invocation (weights fit VMEM).
# ---------------------------------------------------------------------------
def _chain_kernel_fused(x_ref, w_ref, b_ref, o_ref):
    num_shards = w_ref.shape[0]
    act0 = x_ref[...]                          # (B, H) f32 pipeline input

    def shard(l, act):
        w = w_ref[l].astype(jnp.float32)       # (H, H): bf16 in HBM -> f32 math
        b = b_ref[l]                           # (1, H) f32
        h = jnp.dot(act, w, preferred_element_type=jnp.float32) + b
        return jnp.maximum(h, 0.0)             # each worker shard = Linear + ReLU

    out = lax.fori_loop(0, num_shards, shard, act0, unroll=True)
    o_ref[...] = out.astype(o_ref.dtype)       # last shard "to_here()"s the result


# ---------------------------------------------------------------------------
# Streamed path: grid = (batch_blocks, shards).  Weights streamed per shard,
# activation kept resident in the output block across the shard axis.
# ---------------------------------------------------------------------------
def _chain_kernel_streamed(x_ref, w_ref, b_ref, o_ref):
    l = pl.program_id(1)                       # shard index (innermost, "arbitrary")

    @pl.when(l == 0)
    def _():
        o_ref[...] = x_ref[...]                # first shard receives the input

    w = w_ref[...].astype(jnp.float32)         # (H, H) per-shard weight (streamed)
    b = b_ref[l]                               # (1, H) from the resident bias stack
    h = jnp.dot(o_ref[...], w, preferred_element_type=jnp.float32) + b
    o_ref[...] = jnp.maximum(h, 0.0)           # o_ref is the resident activation carrier


@functools.partial(jax.jit, static_argnames=("force_streamed", "batch_block"))
def distributed_sequential_forward(x, weights, biases,
                                   force_streamed=False, batch_block=None):
    """x: [B, H] f32; weights: [L, H, H] (bf16 or f32); biases: [L, 1, H] f32."""
    B, H = x.shape
    L = weights.shape[0]
    assert weights.shape == (L, H, H) and biases.shape == (L, 1, H)

    # Pad batch to the f32 sublane multiple (8) so the (B, H) block is legal.
    Bp = -(-B // 8) * 8
    if Bp != B:
        x = jnp.pad(x, ((0, Bp - B), (0, 0)))

    resident_bytes = (weights.size * weights.dtype.itemsize
                      + biases.size * biases.dtype.itemsize
                      + 3 * Bp * H * 4)
    # 8 MiB keeps comfortable headroom under every generation's scoped VMEM
    # default (16 MiB v5e / 32 MiB v6e-v7x).
    use_fused = (not force_streamed) and (resident_bytes <= 8 * 1024 * 1024)

    if use_fused:
        out = pl.pallas_call(
            _chain_kernel_fused,
            out_shape=jax.ShapeDtypeStruct((Bp, H), x.dtype),
            in_specs=[
                pl.BlockSpec(memory_space=pltpu.MemorySpace.VMEM),   # x
                pl.BlockSpec(memory_space=pltpu.MemorySpace.VMEM),   # all weights
                pl.BlockSpec(memory_space=pltpu.MemorySpace.VMEM),   # all biases
            ],
            out_specs=pl.BlockSpec(memory_space=pltpu.MemorySpace.VMEM),
        )(x, weights, biases)
    else:
        # Pick a batch tile: keep the whole batch in one block unless it is
        # large, in which case split it so megacore can shard the "parallel"
        # batch axis and per-step VMEM stays bounded.
        if batch_block is None:
            if Bp >= 512 and Bp % 256 == 0:
                batch_block = 256
            else:
                batch_block = Bp
        TB = min(batch_block, Bp)
        assert Bp % TB == 0, "batch_block must evenly divide the padded batch"

        out = pl.pallas_call(
            _chain_kernel_streamed,
            out_shape=jax.ShapeDtypeStruct((Bp, H), x.dtype),
            grid_spec=pltpu.PrefetchScalarGridSpec(
                num_scalar_prefetch=0,
                grid=(Bp // TB, L),                                 # shards innermost
                in_specs=[
                    pl.BlockSpec((TB, H), lambda b, l: (b, 0)),                    # x
                    pl.BlockSpec((pl.Squeezed(), H, H), lambda b, l: (l, 0, 0)),   # per-shard W
                    pl.BlockSpec((L, 1, H), lambda b, l: (0, 0, 0)),               # resident bias
                ],
                out_specs=pl.BlockSpec((TB, H), lambda b, l: (b, 0)),              # act carrier
            ),
            compiler_params=pltpu.CompilerParams(
                # batch blocks independent (megacore); shards run sequentially.
                dimension_semantics=("parallel", "arbitrary"),
            ),
        )(x, weights, biases)

    return out[:B] if Bp != B else out


def reference_forward(x, weights, biases):
    h = x
    for l in range(weights.shape[0]):
        w = weights[l].astype(jnp.float32)
        h = jnp.maximum(h @ w + biases[l], 0.0)
    return h


if __name__ == "__main__":
    # TODO(synk): torch.distributed.rpc pipeline plumbing (RRef, to_here,
    # set_next_shard, remote materialize) has no single-device Pallas analog;
    # only the sequential shard-composition semantics of forward() are kept.
    B, H, L = 8, 128, 3  # batch, hidden, number of worker shards

    key = jax.random.PRNGKey(0)
    kx, kw, kb = jax.random.split(key, 3)
    x = jax.random.normal(kx, (B, H), dtype=jnp.float32)
    # Weights stored bf16 in HBM (kernel is weight-bandwidth bound at small B);
    # math stays f32 in-kernel.
    weights = (jax.random.normal(kw, (L, H, H), dtype=jnp.float32) * 0.05).astype(jnp.bfloat16)
    biases = jax.random.normal(kb, (L, 1, H), dtype=jnp.float32) * 0.01

    ref = reference_forward(x, weights, biases)

    # Fused path (default at this size).
    out = distributed_sequential_forward(x, weights, biases)
    jax.block_until_ready(out)
    assert out.shape == (B, H)
    assert jnp.allclose(out, ref, atol=1e-3, rtol=1e-3)

    # Streamed path, single batch block.
    out_s = distributed_sequential_forward(x, weights, biases, force_streamed=True)
    jax.block_until_ready(out_s)
    assert jnp.allclose(out_s, ref, atol=1e-3, rtol=1e-3)

    # Streamed path with a tiled ("parallel") batch axis.
    B2 = 16
    x2 = jax.random.normal(jax.random.PRNGKey(1), (B2, H), dtype=jnp.float32)
    ref2 = reference_forward(x2, weights, biases)
    out_t = distributed_sequential_forward(x2, weights, biases,
                                           force_streamed=True, batch_block=8)
    jax.block_until_ready(out_t)
    assert out_t.shape == (B2, H)
    assert jnp.allclose(out_t, ref2, atol=1e-3, rtol=1e-3)

    print("KERNEL_OK")
</pallas_src>

<mosaic_0001>
module attributes {stable_mosaic.version = 11 : i64} {
  func.func @_chain_kernel_fused(%arg0: memref<8x128xf32, #tpu.memory_space<vmem>>, %arg1: memref<3x128x128xbf16, #tpu.memory_space<vmem>>, %arg2: memref<3x1x128xf32, #tpu.memory_space<vmem>>, %arg3: memref<8x128xf32, #tpu.memory_space<vmem>>) attributes {dimension_semantics = [], scalar_prefetch = 0 : i64, scratch_operands = 0 : i64, tpu.core_type = #tpu.core_type<tc>} {
    %c0 = arith.constant 0 : index
    %c0_0 = arith.constant 0 : index
    %0 = vector.load %arg0[%c0, %c0_0] : memref<8x128xf32, #tpu.memory_space<vmem>>, vector<8x128xf32>
    %c0_i32 = arith.constant 0 : i32
    %1 = arith.index_cast %c0_i32 : i32 to index
    %c0_1 = arith.constant 0 : index
    %c0_2 = arith.constant 0 : index
    %2 = vector.load %arg1[%1, %c0_1, %c0_2] : memref<3x128x128xbf16, #tpu.memory_space<vmem>>, vector<1x128x128xbf16>
    %3 = vector.shape_cast %2 : vector<1x128x128xbf16> to vector<128x128xbf16>
    %4 = arith.extf %3 : vector<128x128xbf16> to vector<128x128xf32>
    %5 = arith.index_cast %c0_i32 : i32 to index
    %c0_3 = arith.constant 0 : index
    %c0_4 = arith.constant 0 : index
    %6 = vector.load %arg2[%5, %c0_3, %c0_4] : memref<3x1x128xf32, #tpu.memory_space<vmem>>, vector<1x1x128xf32>
    %7 = vector.shape_cast %6 : vector<1x1x128xf32> to vector<1x128xf32>
    %cst = arith.constant dense<0.000000e+00> : vector<8x128xf32>
    %8 = tpu.matmul %0, %4, %cst {dimension_numbers = #tpu.dot_dimension_numbers<[1], [0], [0], [1], [0, 0, 1, 1], [], []>} : vector<8x128xf32>, vector<128x128xf32>, vector<8x128xf32> -> vector<8x128xf32>
    %9 = vector.broadcast %7 : vector<1x128xf32> to vector<8x128xf32>
    %10 = arith.addf %8, %9 : vector<8x128xf32>
    %cst_5 = arith.constant 0.000000e+00 : f32
    %11 = vector.broadcast %cst_5 : f32 to vector<8x128xf32>
    %12 = arith.maximumf %10, %11 : vector<8x128xf32>
    %c1_i32 = arith.constant 1 : i32
    %13 = arith.index_cast %c1_i32 : i32 to index
    %c0_6 = arith.constant 0 : index
    %c0_7 = arith.constant 0 : index
    %14 = vector.load %arg1[%13, %c0_6, %c0_7] : memref<3x128x128xbf16, #tpu.memory_space<vmem>>, vector<1x128x128xbf16>
    %15 = vector.shape_cast %14 : vector<1x128x128xbf16> to vector<128x128xbf16>
    %16 = arith.extf %15 : vector<128x128xbf16> to vector<128x128xf32>
    %17 = arith.index_cast %c1_i32 : i32 to index
    %c0_8 = arith.constant 0 : index
    %c0_9 = arith.constant 0 : index
    %18 = vector.load %arg2[%17, %c0_8, %c0_9] : memref<3x1x128xf32, #tpu.memory_space<vmem>>, vector<1x1x128xf32>
    %19 = vector.shape_cast %18 : vector<1x1x128xf32> to vector<1x128xf32>
    %cst_10 = arith.constant dense<0.000000e+00> : vector<8x128xf32>
    %20 = tpu.matmul %12, %16, %cst_10 {dimension_numbers = #tpu.dot_dimension_numbers<[1], [0], [0], [1], [0, 0, 1, 1], [], []>} : vector<8x128xf32>, vector<128x128xf32>, vector<8x128xf32> -> vector<8x128xf32>
    %21 = vector.broadcast %19 : vector<1x128xf32> to vector<8x128xf32>
    %22 = arith.addf %20, %21 : vector<8x128xf32>
    %cst_11 = arith.constant 0.000000e+00 : f32
    %23 = vector.broadcast %cst_11 : f32 to vector<8x128xf32>
    %24 = arith.maximumf %22, %23 : vector<8x128xf32>
    %c2_i32 = arith.constant 2 : i32
    %25 = arith.index_cast %c2_i32 : i32 to index
    %c0_12 = arith.constant 0 : index
    %c0_13 = arith.constant 0 : index
    %26 = vector.load %arg1[%25, %c0_12, %c0_13] : memref<3x128x128xbf16, #tpu.memory_space<vmem>>, vector<1x128x128xbf16>
    %27 = vector.shape_cast %26 : vector<1x128x128xbf16> to vector<128x128xbf16>
    %28 = arith.extf %27 : vector<128x128xbf16> to vector<128x128xf32>
    %29 = arith.index_cast %c2_i32 : i32 to index
    %c0_14 = arith.constant 0 : index
    %c0_15 = arith.constant 0 : index
    %30 = vector.load %arg2[%29, %c0_14, %c0_15] : memref<3x1x128xf32, #tpu.memory_space<vmem>>, vector<1x1x128xf32>
    %31 = vector.shape_cast %30 : vector<1x1x128xf32> to vector<1x128xf32>
    %cst_16 = arith.constant dense<0.000000e+00> : vector<8x128xf32>
    %32 = tpu.matmul %24, %28, %cst_16 {dimension_numbers = #tpu.dot_dimension_numbers<[1], [0], [0], [1], [0, 0, 1, 1], [], []>} : vector<8x128xf32>, vector<128x128xf32>, vector<8x128xf32> -> vector<8x128xf32>
    %33 = vector.broadcast %31 : vector<1x128xf32> to vector<8x128xf32>
    %34 = arith.addf %32, %33 : vector<8x128xf32>
    %cst_17 = arith.constant 0.000000e+00 : f32
    %35 = vector.broadcast %cst_17 : f32 to vector<8x128xf32>
    %36 = arith.maximumf %34, %35 : vector<8x128xf32>
    %c3_i32 = arith.constant 3 : i32
    %c0_18 = arith.constant 0 : index
    %c0_19 = arith.constant 0 : index
    %37 = vector.load %arg3[%c0_18, %c0_19] : memref<8x128xf32, #tpu.memory_space<vmem>>, vector<8x128xf32>
    tpu.vector_store %arg3[%c0_18, %c0_19], %36 {strides = array<i32>} : memref<8x128xf32, #tpu.memory_space<vmem>>, vector<8x128xf32>,
    return
  }
}

</mosaic_0001>

<llo_original>
// kernel: distributed_sequential_forward.1
$region0: #{distributed_sequential_forward.1}
  #allocation0 [shape = 'u32[]', space=smem, size = 0x4, offset = 0x4, fixed_abs, tag = 'smem constant byte address 0x4 - core index']
  #allocation1 [shape = 'u32[72,128]{1,0:T(1,128)}', space=vmem, size = 0x9000, scoped, tag = 'internal scratch']
  %s0 = inlined_call_operand.hbm [shape: f32[8,128], index: 0, kind: input, shape index: {}]
  %s1 = inlined_call_operand.hbm [shape: bf16[3,128,128], index: 1, kind: input, shape index: {}]
  %s2 = inlined_call_operand.hbm [shape: f32[3,1,128], index: 2, kind: input, shape index: {}]
  %s3 = inlined_call_operand.hbm [shape: f32[8,128], index: 3, kind: output, shape index: {}]
  %s4 = sld [smem:[#allocation0]]
  $region34: #{distributed_sequential_forward.1} parent=0
    _
  %s6 = ssub.s32 1, %s4
  %s7 = scalar_select 0, %s6, %s4
  $region1: #{distributed_sequential_forward.1} parent=0
    #allocation2 [shape = 'u8[4096]{0}', space=vmem, size = 0x1000, scoped, tag = 'input window, operand 0, single buffered']
    #allocation3 [shape = 's32[1]{0}', space=sflag, size = 0x4, scoped, tag = 'scoped memory for distributed_sequential_forward.1']
    #allocation4 [shape = 's32[1]{0}', space=sflag, size = 0x4, scoped, tag = 'scoped memory for distributed_sequential_forward.1']
    #allocation5 [shape = 'u8[98304]{0}', space=vmem, size = 0x18000, scoped, tag = 'input window, operand 1, single buffered']
    #allocation6 [shape = 's32[1]{0}', space=sflag, size = 0x4, scoped, tag = 'scoped memory for distributed_sequential_forward.1']
    #allocation7 [shape = 'u8[1536]{0}', space=vmem, size = 0x800, scoped, tag = 'input window, operand 2, single buffered']
    #allocation8 [shape = 'u8[4096]{0}', space=vmem, size = 0x1000, scoped, tag = 'output window, operand 0, single buffered']
    %8 = vsyncpa [#allocation3], 0
    %9 = vsyncpa [#allocation6], 0
    %10 = vsyncpa [#allocation4], 0
    // Predicated region
    $region2: #{distributed_sequential_forward.1} parent=1 // pred_check
      _
    $region3: #{distributed_sequential_forward.1} parent=1 // pred_check_branch
      %12 = sbr.rel (0) target = $region5
    $region4: #{distributed_sequential_forward.1} parent=1 // pred_region
      %14 = vsyncadd [#allocation3], 0
      %s16 = sshll.u32 %s0, 4
      %s17 = int_to_ptr.hbm [resolvable:$true] %s16
      %s18 = sshll.u32 [#allocation2], 4
      %s19 = int_to_ptr.vmem [resolvable:$true] %s18
      %21 = dma.hbm_to_vmem [thread:$0]  %s17, 128, %s19, [#allocation3]
    $region5: #{distributed_sequential_forward.1} parent=1 // pred_fallthru
      _
    // Predicated region
    $region6: #{distributed_sequential_forward.1} parent=1 // pred_check
      _
    $region7: #{distributed_sequential_forward.1} parent=1 // pred_check_branch
      %23 = sbr.rel (0) target = $region9
    $region8: #{distributed_sequential_forward.1} parent=1 // pred_region
      %25 = vsyncadd [#allocation6], 0
      %s26 = sshll.u32 %s1, 4
      %s27 = int_to_ptr.hbm [resolvable:$true] %s26
      %s28 = sshll.u32 [#allocation5], 4
      %s29 = int_to_ptr.vmem [resolvable:$true] %s28
      %34 = dma.hbm_to_vmem [thread:$0]  %s27, 3072, %s29, [#allocation6], 64, 64, 4
    $region9: #{distributed_sequential_forward.1} parent=1 // pred_fallthru
      _
    // Predicated region
    $region10: #{distributed_sequential_forward.1} parent=1 // pred_check
      _
    $region11: #{distributed_sequential_forward.1} parent=1 // pred_check_branch
      %36 = sbr.rel (0) target = $region13
    $region12: #{distributed_sequential_forward.1} parent=1 // pred_region
      %38 = vsyncadd [#allocation6], 0
      %s39 = sshll.u32 %s2, 4
      %s40 = int_to_ptr.hbm [resolvable:$true] %s39
      %s41 = sshll.u32 [#allocation7], 4
      %s42 = int_to_ptr.vmem [resolvable:$true] %s41
      %47 = dma.hbm_to_vmem [thread:$0]  %s40, 48, %s42, [#allocation6], 16, 16, 1
    $region13: #{distributed_sequential_forward.1} parent=1 // pred_fallthru
      _
    // Predicated region
    $region14: #{distributed_sequential_forward.1} parent=1 // pred_check
      _
    $region15: #{distributed_sequential_forward.1} parent=1 // pred_check_branch
      %49 = sbr.rel (0) target = $region17
    $region16: #{distributed_sequential_forward.1} parent=1 // pred_region
      %51 = dma.done [#allocation3], 128
    $region17: #{distributed_sequential_forward.1} parent=1 // pred_fallthru
      _
    // Predicated region
    $region18: #{distributed_sequential_forward.1} parent=1 // pred_check
      _
    $region19: #{distributed_sequential_forward.1} parent=1 // pred_check_branch
      %53 = sbr.rel (0) target = $region21
    $region20: #{distributed_sequential_forward.1} parent=1 // pred_region
      %55 = dma.done [#allocation6], 3072
    $region21: #{distributed_sequential_forward.1} parent=1 // pred_fallthru
      _
    // Predicated region
    $region22: #{distributed_sequential_forward.1} parent=1 // pred_check
      _
    $region23: #{distributed_sequential_forward.1} parent=1 // pred_check_branch
      %57 = sbr.rel (0) target = $region25
    $region24: #{distributed_sequential_forward.1} parent=1 // pred_region
      %59 = dma.done [#allocation6], 48
    $region25: #{distributed_sequential_forward.1} parent=1 // pred_fallthru
      _
    %v60 = vld [vmem:[#allocation2] sm:$0xff]
    %v61 = vld [vmem:[#allocation5] sm:$0xf]
    %v62 = vld [vmem:[#allocation5 + $0x4] sm:$0xf]
    %v63 = vld [vmem:[#allocation5 + $0x8] sm:$0xf]
    %v64 = vld [vmem:[#allocation5 + $0xc] sm:$0xf]
    %v65 = vld [vmem:[#allocation5 + $0x10] sm:$0xf]
    %v66 = vld [vmem:[#allocation5 + $0x14] sm:$0xf]
    %v67 = vld [vmem:[#allocation5 + $0x18] sm:$0xf]
    %v68 = vld [vmem:[#allocation5 + $0x1c] sm:$0xf]
    %v69 = vld [vmem:[#allocation5 + $0x20] sm:$0xf]
    %v70 = vld [vmem:[#allocation5 + $0x24] sm:$0xf]
    %v71 = vld [vmem:[#allocation5 + $0x28] sm:$0xf]
    %v72 = vld [vmem:[#allocation5 + $0x2c] sm:$0xf]
    %v73 = vld [vmem:[#allocation5 + $0x30] sm:$0xf]
    %v74 = vld [vmem:[#allocation5 + $0x34] sm:$0xf]
    %v75 = vld [vmem:[#allocation5 + $0x38] sm:$0xf]
    %v76 = vld [vmem:[#allocation5 + $0x3c] sm:$0xf]
    %v77 = vunpack.c.l.bf16 %v61
    %v78 = vunpack.c.l.bf16 %v62
    %v79 = vunpack.c.l.bf16 %v63
    %v80 = vunpack.c.l.bf16 %v64
    %v81 = vunpack.c.l.bf16 %v65
    %v82 = vunpack.c.l.bf16 %v66
    %v83 = vunpack.c.l.bf16 %v67
    %v84 = vunpack.c.l.bf16 %v68
    %v85 = vunpack.c.l.bf16 %v69
    %v86 = vunpack.c.l.bf16 %v70
    %v87 = vunpack.c.l.bf16 %v71
    %v88 = vunpack.c.l.bf16 %v72
    %v89 = vunpack.c.l.bf16 %v73
    %v90 = vunpack.c.l.bf16 %v74
    %v91 = vunpack.c.l.bf16 %v75
    %v92 = vunpack.c.l.bf16 %v76
    %v93 = vld [vmem:[#allocation7] sm:$0x1]
    %v95 = vperm.slane %v93, 0
    %97 = vmatpush.msra.mxu0 %v92
    %98 = vmatpush.msra.mxu0 %v91
    %99 = vmatpush.msra.mxu0 %v90
    %100 = vmatpush.msra.mxu0 %v89
    %101 = vmatpush.msra.mxu0 %v88
    %102 = vmatpush.msra.mxu0 %v87
    %103 = vmatpush.msra.mxu0 %v86
    %104 = vmatpush.msra.mxu0 %v85
    %105 = vmatpush.msra.mxu0 %v84
    %106 = vmatpush.msra.mxu0 %v83
    %107 = vmatpush.msra.mxu0 %v82
    %108 = vmatpush.msra.mxu0 %v81
    %109 = vmatpush.msra.mxu0 %v80
    %110 = vmatpush.msra.mxu0 %v79
    %111 = vmatpush.msra.mxu0 %v78
    %112 = vmatpush.msra.mxu0 %v77
    %113 = vmatmul.f32.gmra.mxu0 %v60
    %v114 = vpop.f32.mrf.mxu0
    %v115 = vadd.f32 %v95, %v114
    %116 = vdwg.mxu0
    %v117 = vmax.f32 %v115, 0.0
    %s118 = scalar_lea.vmem [#allocation5], 64
    %v119 = vld [vmem:[%s118] sm:$0xf]
    %v120 = vld [vmem:[%s118 + $0x4] sm:$0xf]
    %v121 = vld [vmem:[%s118 + $0x8] sm:$0xf]
    %v122 = vld [vmem:[%s118 + $0xc] sm:$0xf]
    %v123 = vld [vmem:[%s118 + $0x10] sm:$0xf]
    %v124 = vld [vmem:[%s118 + $0x14] sm:$0xf]
    %v125 = vld [vmem:[%s118 + $0x18] sm:$0xf]
    %v126 = vld [vmem:[%s118 + $0x1c] sm:$0xf]
    %v127 = vld [vmem:[%s118 + $0x20] sm:$0xf]
    %v128 = vld [vmem:[%s118 + $0x24] sm:$0xf]
    %v129 = vld [vmem:[%s118 + $0x28] sm:$0xf]
    %v130 = vld [vmem:[%s118 + $0x2c] sm:$0xf]
    %v131 = vld [vmem:[%s118 + $0x30] sm:$0xf]
    %v132 = vld [vmem:[%s118 + $0x34] sm:$0xf]
    %v133 = vld [vmem:[%s118 + $0x38] sm:$0xf]
    %v134 = vld [vmem:[%s118 + $0x3c] sm:$0xf]
    %v135 = vunpack.c.l.bf16 %v119
    %v136 = vunpack.c.l.bf16 %v120
    %v137 = vunpack.c.l.bf16 %v121
    %v138 = vunpack.c.l.bf16 %v122
    %v139 = vunpack.c.l.bf16 %v123
    %v140 = vunpack.c.l.bf16 %v124
    %v141 = vunpack.c.l.bf16 %v125
    %v142 = vunpack.c.l.bf16 %v126
    %v143 = vunpack.c.l.bf16 %v127
    %v144 = vunpack.c.l.bf16 %v128
    %v145 = vunpack.c.l.bf16 %v129
    %v146 = vunpack.c.l.bf16 %v130
    %v147 = vunpack.c.l.bf16 %v131
    %v148 = vunpack.c.l.bf16 %v132
    %v149 = vunpack.c.l.bf16 %v133
    %v150 = vunpack.c.l.bf16 %v134
    %s151 = scalar_lea.vmem [#allocation7], 1
    %v152 = vld [vmem:[%s151] sm:$0x1]
    %v154 = vperm.slane %v152, 0
    %156 = vmatpush.msra.mxu0 %v150
    %157 = vmatpush.msra.mxu0 %v149
    %158 = vmatpush.msra.mxu0 %v148
    %159 = vmatpush.msra.mxu0 %v147
    %160 = vmatpush.msra.mxu0 %v146
    %161 = vmatpush.msra.mxu0 %v145
    %162 = vmatpush.msra.mxu0 %v144
    %163 = vmatpush.msra.mxu0 %v143
    %164 = vmatpush.msra.mxu0 %v142
    %165 = vmatpush.msra.mxu0 %v141
    %166 = vmatpush.msra.mxu0 %v140
    %167 = vmatpush.msra.mxu0 %v139
    %168 = vmatpush.msra.mxu0 %v138
    %169 = vmatpush.msra.mxu0 %v137
    %170 = vmatpush.msra.mxu0 %v136
    %171 = vmatpush.msra.mxu0 %v135
    %172 = vmatmul.f32.gmra.mxu0 %v117
    %v173 = vpop.f32.mrf.mxu0
    %v174 = vadd.f32 %v154, %v173
    %175 = vdwg.mxu0
    %v176 = vmax.f32 %v174, 0.0
    %s177 = scalar_lea.vmem [#allocation5], 128
    %v178 = vld [vmem:[%s177] sm:$0xf]
    %v179 = vld [vmem:[%s177 + $0x4] sm:$0xf]
    %v180 = vld [vmem:[%s177 + $0x8] sm:$0xf]
    %v181 = vld [vmem:[%s177 + $0xc] sm:$0xf]
    %v182 = vld [vmem:[%s177 + $0x10] sm:$0xf]
    %v183 = vld [vmem:[%s177 + $0x14] sm:$0xf]
    %v184 = vld [vmem:[%s177 + $0x18] sm:$0xf]
    %v185 = vld [vmem:[%s177 + $0x1c] sm:$0xf]
    %v186 = vld [vmem:[%s177 + $0x20] sm:$0xf]
    %v187 = vld [vmem:[%s177 + $0x24] sm:$0xf]
    %v188 = vld [vmem:[%s177 + $0x28] sm:$0xf]
    %v189 = vld [vmem:[%s177 + $0x2c] sm:$0xf]
    %v190 = vld [vmem:[%s177 + $0x30] sm:$0xf]
    %v191 = vld [vmem:[%s177 + $0x34] sm:$0xf]
    %v192 = vld [vmem:[%s177 + $0x38] sm:$0xf]
    %v193 = vld [vmem:[%s177 + $0x3c] sm:$0xf]
    %v194 = vunpack.c.l.bf16 %v178
    %v195 = vunpack.c.l.bf16 %v179
    %v196 = vunpack.c.l.bf16 %v180
    %v197 = vunpack.c.l.bf16 %v181
    %v198 = vunpack.c.l.bf16 %v182
    %v199 = vunpack.c.l.bf16 %v183
    %v200 = vunpack.c.l.bf16 %v184
    %v201 = vunpack.c.l.bf16 %v185
    %v202 = vunpack.c.l.bf16 %v186
    %v203 = vunpack.c.l.bf16 %v187
    %v204 = vunpack.c.l.bf16 %v188
    %v205 = vunpack.c.l.bf16 %v189
    %v206 = vunpack.c.l.bf16 %v190
    %v207 = vunpack.c.l.bf16 %v191
    %v208 = vunpack.c.l.bf16 %v192
    %v209 = vunpack.c.l.bf16 %v193
    %s210 = scalar_lea.vmem [#allocation7], 2
    %v211 = vld [vmem:[%s210] sm:$0x1]
    %v213 = vperm.slane %v211, 0
    %215 = vmatpush.msra.mxu0 %v209
    %216 = vmatpush.msra.mxu0 %v208
    %217 = vmatpush.msra.mxu0 %v207
    %218 = vmatpush.msra.mxu0 %v206
    %219 = vmatpush.msra.mxu0 %v205
    %220 = vmatpush.msra.mxu0 %v204
    %221 = vmatpush.msra.mxu0 %v203
    %222 = vmatpush.msra.mxu0 %v202
    %223 = vmatpush.msra.mxu0 %v201
    %224 = vmatpush.msra.mxu0 %v200
    %225 = vmatpush.msra.mxu0 %v199
    %226 = vmatpush.msra.mxu0 %v198
    %227 = vmatpush.msra.mxu0 %v197
    %228 = vmatpush.msra.mxu0 %v196
    %229 = vmatpush.msra.mxu0 %v195
    %230 = vmatpush.msra.mxu0 %v194
    %231 = vmatmul.f32.gmra.mxu0 %v176
    %v232 = vpop.f32.mrf.mxu0
    %v233 = vadd.f32 %v213, %v232
    %234 = vdwg.mxu0
    %v235 = vmax.f32 %v233, 0.0
    %236 = vst [vmem:[#allocation8] sm:$0xff] %v235
    // Predicated region
    $region26: #{distributed_sequential_forward.1} parent=1 // pred_check
      _
    $region27: #{distributed_sequential_forward.1} parent=1 // pred_check_branch
      %238 = sbr.rel (0) target = $region29
    $region28: #{distributed_sequential_forward.1} parent=1 // pred_region
      %240 = vsyncadd [#allocation4], 0
      %s242 = sshll.u32 [#allocation8], 4
      %s243 = int_to_ptr.vmem [resolvable:$true] %s242
      %s244 = sshll.u32 %s3, 4
      %s245 = int_to_ptr.hbm [resolvable:$true] %s244
      %247 = dma.vmem_to_hbm [thread:$0]  %s243, 128, %s245, [#allocation4]
    $region29: #{distributed_sequential_forward.1} parent=1 // pred_fallthru
      _
    // Predicated region
    $region30: #{distributed_sequential_forward.1} parent=1 // pred_check
      _
    $region31: #{distributed_sequential_forward.1} parent=1 // pred_check_branch
      %249 = sbr.rel (0) target = $region33
    $region32: #{distributed_sequential_forward.1} parent=1 // pred_region
      %251 = dma.done [#allocation4], 128
    $region33: #{distributed_sequential_forward.1} parent=1 // pred_fallthru
      _
    %252 = vsyncpa [#allocation3], 1
    %253 = vsyncpa [#allocation6], 1
    %254 = vsyncpa [#allocation4], 1

</llo_original>
